<compile_context>
chip_gen: v7x
topology: tpu7x:2x2x1
jax: 0.10.0
libtpu: 0.0.40
codegen_flags: <defaults>
</compile_context>

<pallas_src>
import jax
import jax.numpy as jnp
from jax.experimental import pallas as pl
from jax.experimental.pallas import tpu as pltpu


def _round_up(n, m):
    return ((n + m - 1) // m) * m


def _cdiv(a, b):
    return -(-a // b)


# --------------------------------------------------------------------------
# Kernel: one fused pass over a (tile_b, Dp) batch tile with resident weights.
# --------------------------------------------------------------------------
def attention_block_kernel(x_ref, wqk_ref, bqk_ref, wn_ref, bn_ref,
                           wo_ref, bo_ref, o_ref):
    x = x_ref[...].astype(jnp.float32)                # (TB, Dp) f32
    dp = wn_ref.shape[0]                              # static, 128/256-aligned
    xm = x.astype(wqk_ref.dtype)                      # bf16 operand for the MXU

    # Fused Q|K projection: one MXU pass instead of two.
    qk = jnp.dot(xm, wqk_ref[...], preferred_element_type=jnp.float32)
    qk = jnp.maximum(qk + bqk_ref[...], 0.0)          # relu(query) | relu(key)
    q = qk[:, :dp]                                    # lane-aligned slices
    k = qk[:, dp:]

    # attention_weights = sigmoid(Q + K); out = attention_weights * V (V = x)
    attn_w = jax.nn.sigmoid(q + k)
    out = attn_w * x

    # attention_weights2 = sigmoid(relu(nnout(out)))
    n = jnp.dot(out.astype(wn_ref.dtype), wn_ref[...],
                preferred_element_type=jnp.float32) + bn_ref[...]
    attn_w2 = jax.nn.sigmoid(jnp.maximum(n, 0.0))

    # F2 = x + attention_weights2 * out ; y = output_linear(F2)
    f2 = x + attn_w2 * out
    y = jnp.dot(f2.astype(wo_ref.dtype), wo_ref[...],
                preferred_element_type=jnp.float32) + bo_ref[...]
    o_ref[...] = y.astype(o_ref.dtype)


# --------------------------------------------------------------------------
# Host-side helpers: chip-aware VMEM budget, weight prep, tile sizing.
# --------------------------------------------------------------------------
def _vmem_capacity_bytes():
    try:
        cap = int(pltpu.get_tpu_info().vmem_capacity_bytes)
        if cap > 0:
            return cap
    except Exception:
        pass
    return 64 * 1024 * 1024          # conservative default: v7x per-core VMEM


def _vmem_limit_bytes():
    # Leave ~20% headroom for Mosaic internal scratch; never ask for the whole
    # physical VMEM (that was wrong on v7x, whose capacity *is* 64 MiB).
    return min(int(_vmem_capacity_bytes() * 0.78), 100 * 1024 * 1024)


def _feat_align(d):
    # 128 fills v5e's 4x128x128 MXU and avoids wasted FLOPs at small D;
    # 256 fills the 2x256x256 MXU on v6e/v7x once D is large enough.
    return 128 if d <= 256 else 256


def _pad2(a, r, c):
    return jnp.pad(a, ((0, r - a.shape[0]), (0, c - a.shape[1])))


def prepare_params(params, *, matmul_dtype=jnp.bfloat16):
    """Pad / fuse / cast the weights once; reuse the result across calls."""
    if params.get("_prepared", False):
        return params
    D = params["wq"].shape[0]
    Dout = params["wo"].shape[1]
    Dp = _round_up(max(D, 128), _feat_align(D))
    Dop = _round_up(max(Dout, 128), _feat_align(Dout))

    wqk = jnp.concatenate([_pad2(params["wq"], Dp, Dp),
                           _pad2(params["wk"], Dp, Dp)],
                          axis=1).astype(matmul_dtype)
    bqk = jnp.concatenate([_pad2(params["bq"], 1, Dp),
                           _pad2(params["bk"], 1, Dp)],
                          axis=1).astype(jnp.float32)
    wn = _pad2(params["wn"], Dp, Dp).astype(matmul_dtype)
    bn = _pad2(params["bn"], 1, Dp).astype(jnp.float32)
    wo = _pad2(params["wo"], Dp, Dop).astype(matmul_dtype)
    bo = _pad2(params["bo"], 1, Dop).astype(jnp.float32)
    return {"_prepared": True, "D": D, "Dout": Dout, "Dp": Dp, "Dop": Dop,
            "wqk": wqk, "bqk": bqk, "wn": wn, "bn": bn, "wo": wo, "bo": bo}


def _auto_tile_b(B, Dp, Dop, weight_bytes, vmem_limit):
    # Per-row VMEM cost (bytes) for one grid step:
    #   double-buffered x tile (f32)                : 2 * Dp * 4
    #   double-buffered y tile (<=f32)              : 2 * Dop * 4
    #   f32 intermediates (qk=2Dp, attn_w, out, n,
    #   attn_w2, f2, ...)                           : ~8 * Dp * 4
    #   bf16 casts of the three matmul LHS          : ~3 * Dp * 2
    per_row = 2 * Dp * 4 + 2 * Dop * 4 + 8 * Dp * 4 + 3 * Dp * 2
    avail = vmem_limit - weight_bytes - (2 << 20)      # 2 MiB slack
    max_rows = 8 if avail <= 0 else max(8, (avail // per_row) // 8 * 8)
    max_rows = min(max_rows, 1024)

    # >= 2 grid steps whenever the batch permits it, so the "parallel" batch
    # axis can shard across v7x's two TensorCores; divide B as evenly as
    # possible so Bp padding stays small.
    min_tiles = 2 if B >= 16 else 1
    n_tiles = max(min_tiles, _cdiv(B, max_rows))
    return min(max_rows, _round_up(_cdiv(B, n_tiles), 8))


# --------------------------------------------------------------------------
# Public forward.
# --------------------------------------------------------------------------
def attention_block_t(x, params, *, tile_b=None, matmul_dtype=jnp.bfloat16,
                      out_dtype=jnp.float32):
    """x: (B, D).  params: raw init_params dict or prepare_params() output."""
    prep = prepare_params(params, matmul_dtype=matmul_dtype)
    B, D = x.shape
    assert D == prep["D"], (D, prep["D"])
    Dout, Dp, Dop = prep["Dout"], prep["Dp"], prep["Dop"]

    weight_bytes = sum(int(prep[k].size) * prep[k].dtype.itemsize
                       for k in ("wqk", "bqk", "wn", "bn", "wo", "bo"))
    vmem_limit = _vmem_limit_bytes()
    if tile_b is None:
        tile_b = _auto_tile_b(B, Dp, Dop, weight_bytes, vmem_limit)
    Bp = _round_up(max(B, tile_b), tile_b)

    # Zero padding: padded feature columns are zero in weights/biases, so the
    # valid [:B, :Dout] slice of the result is unchanged.
    x_p = jnp.pad(x, ((0, Bp - B), (0, Dp - D)))

    def call(weight_pipeline_mode):
        if weight_pipeline_mode is None:
            const = lambda shape: pl.BlockSpec(shape, lambda i: (0, 0))
        else:
            const = lambda shape: pl.BlockSpec(
                shape, lambda i: (0, 0), pipeline_mode=weight_pipeline_mode)
        return pl.pallas_call(
            attention_block_kernel,
            out_shape=jax.ShapeDtypeStruct((Bp, Dop), out_dtype),
            grid_spec=pltpu.PrefetchScalarGridSpec(
                num_scalar_prefetch=0,
                grid=(Bp // tile_b,),
                in_specs=[
                    pl.BlockSpec((tile_b, Dp), lambda i: (i, 0)),   # x tile
                    const((Dp, 2 * Dp)), const((1, 2 * Dp)),        # fused Q|K
                    const((Dp, Dp)),     const((1, Dp)),            # nnout
                    const((Dp, Dop)),    const((1, Dop)),           # output
                ],
                out_specs=pl.BlockSpec((tile_b, Dop), lambda i: (i, 0)),
            ),
            compiler_params=pltpu.CompilerParams(
                dimension_semantics=("parallel",),
                vmem_limit_bytes=vmem_limit),
        )(x_p, prep["wqk"], prep["bqk"], prep["wn"], prep["bn"],
          prep["wo"], prep["bo"])

    try:
        # Constant index_map => the weights are DMA'd once; single-buffer them
        # so they don't occupy 2x VMEM.
        y_p = call(pl.Buffered(1))
    except Exception:
        y_p = call(None)            # fall back to default double-buffering

    # NOTE: padded batch rows of y_p equal bo (non-zero); never expose y_p.
    return y_p[:B, :Dout]


# --------------------------------------------------------------------------
# Deterministic synthetic parameters + pure-JAX reference.
# --------------------------------------------------------------------------
def init_params(key, input_output_dim, input_dim):
    """Shapes match the nn.Linear layers; stored as (in, out) = torch W.T."""
    D, Dout = input_output_dim, input_dim
    ks = jax.random.split(key, 8)
    scale = 0.1
    return {
        "wq": scale * jax.random.normal(ks[0], (D, D), jnp.float32),
        "bq": scale * jax.random.normal(ks[1], (1, D), jnp.float32),
        "wk": scale * jax.random.normal(ks[2], (D, D), jnp.float32),
        "bk": scale * jax.random.normal(ks[3], (1, D), jnp.float32),
        "wn": scale * jax.random.normal(ks[4], (D, D), jnp.float32),
        "bn": scale * jax.random.normal(ks[5], (1, D), jnp.float32),
        "wo": scale * jax.random.normal(ks[6], (D, Dout), jnp.float32),
        "bo": scale * jax.random.normal(ks[7], (1, Dout), jnp.float32),
    }


def reference_forward(x, p):
    """Pure-JAX f32 reference of the PyTorch forward (correctness check)."""
    q = jax.nn.relu(x @ p["wq"] + p["bq"])
    k = jax.nn.relu(x @ p["wk"] + p["bk"])
    out = jax.nn.sigmoid(q + k) * x
    w2 = jax.nn.sigmoid(jax.nn.relu(out @ p["wn"] + p["bn"]))
    f2 = x + w2 * out
    return f2 @ p["wo"] + p["bo"]


if __name__ == "__main__":
    B = 8                 # batch
    D = 32                # input_output_dim (hidden width)
    DOUT = 4              # input_dim == data_x.size(1)

    key = jax.random.PRNGKey(0)
    kx, kp = jax.random.split(key)
    x = jax.random.normal(kx, (B, D), jnp.float32)
    params = init_params(kp, D, DOUT)

    prep = prepare_params(params)          # weight prep hoisted / reusable
    y = jax.block_until_ready(attention_block_t(x, prep))
    y_ref = reference_forward(x, params)

    assert y.shape == (B, DOUT)
    # bf16 MXU operands with f32 accumulation: error grows ~sqrt(D), so use a
    # combined absolute + relative bound rather than a fixed absolute one.
    abs_err = jnp.max(jnp.abs(y - y_ref))
    assert abs_err < 1e-2 + 2e-2 * jnp.max(jnp.abs(y_ref)), abs_err

    print("KERNEL_OK")
</pallas_src>

<mosaic_0001>
module attributes {stable_mosaic.version = 11 : i64} {
  func.func @attention_block_kernel(%arg0: i32, %arg1: memref<8x128xf32, #tpu.memory_space<vmem>>, %arg2: memref<128x256xbf16, #tpu.memory_space<vmem>>, %arg3: memref<1x256xf32, #tpu.memory_space<vmem>>, %arg4: memref<128x128xbf16, #tpu.memory_space<vmem>>, %arg5: memref<1x128xf32, #tpu.memory_space<vmem>>, %arg6: memref<128x128xbf16, #tpu.memory_space<vmem>>, %arg7: memref<1x128xf32, #tpu.memory_space<vmem>>, %arg8: memref<8x128xf32, #tpu.memory_space<vmem>>) attributes {dimension_semantics = [#tpu.dimension_semantics<parallel>], iteration_bounds = array<i64: 1>, scalar_prefetch = 0 : i64, scratch_operands = 0 : i64, tpu.core_type = #tpu.core_type<tc>, window_params = [{transform_indices = @transform_0, window_bounds = array<i64: 8, 128>}, {pipeline_mode = #tpu.pipeline_mode<synchronous>, transform_indices = @transform_1, window_bounds = array<i64: 128, 256>}, {pipeline_mode = #tpu.pipeline_mode<synchronous>, transform_indices = @transform_2, window_bounds = array<i64: 1, 256>}, {pipeline_mode = #tpu.pipeline_mode<synchronous>, transform_indices = @transform_3, window_bounds = array<i64: 128, 128>}, {pipeline_mode = #tpu.pipeline_mode<synchronous>, transform_indices = @transform_4, window_bounds = array<i64: 1, 128>}, {pipeline_mode = #tpu.pipeline_mode<synchronous>, transform_indices = @transform_5, window_bounds = array<i64: 128, 128>}, {pipeline_mode = #tpu.pipeline_mode<synchronous>, transform_indices = @transform_6, window_bounds = array<i64: 1, 128>}, {transform_indices = @transform_7, window_bounds = array<i64: 8, 128>}]} {
    %c0 = arith.constant 0 : index
    %c0_0 = arith.constant 0 : index
    %0 = vector.load %arg1[%c0, %c0_0] : memref<8x128xf32, #tpu.memory_space<vmem>>, vector<8x128xf32>
    %1 = arith.truncf %0 : vector<8x128xf32> to vector<8x128xbf16>
    %c0_1 = arith.constant 0 : index
    %c0_2 = arith.constant 0 : index
    %2 = vector.load %arg2[%c0_1, %c0_2] : memref<128x256xbf16, #tpu.memory_space<vmem>>, vector<128x256xbf16>
    %cst = arith.constant dense<0.000000e+00> : vector<8x256xf32>
    %3 = tpu.matmul %1, %2, %cst {dimension_numbers = #tpu.dot_dimension_numbers<[1], [0], [0], [1], [0, 0, 1, 1], [], []>} : vector<8x128xbf16>, vector<128x256xbf16>, vector<8x256xf32> -> vector<8x256xf32>
    %c0_3 = arith.constant 0 : index
    %c0_4 = arith.constant 0 : index
    %4 = vector.load %arg3[%c0_3, %c0_4] : memref<1x256xf32, #tpu.memory_space<vmem>>, vector<1x256xf32>
    %5 = vector.broadcast %4 : vector<1x256xf32> to vector<8x256xf32>
    %6 = arith.addf %3, %5 : vector<8x256xf32>
    %cst_5 = arith.constant 0.000000e+00 : f32
    %7 = vector.broadcast %cst_5 : f32 to vector<8x256xf32>
    %8 = arith.maximumf %6, %7 : vector<8x256xf32>
    %9 = vector.extract_strided_slice %8 {offsets = [0, 0], sizes = [8, 128], strides = [1, 1]} : vector<8x256xf32> to vector<8x128xf32>
    %10 = vector.extract_strided_slice %8 {offsets = [0, 128], sizes = [8, 128], strides = [1, 1]} : vector<8x256xf32> to vector<8x128xf32>
    %11 = arith.addf %9, %10 : vector<8x128xf32>
    %12 = arith.negf %11 : vector<8x128xf32>
    %13 = math.exp %12 : vector<8x128xf32>
    %cst_6 = arith.constant 1.000000e+00 : f32
    %14 = vector.broadcast %cst_6 : f32 to vector<8x128xf32>
    %15 = arith.addf %14, %13 : vector<8x128xf32>
    %16 = arith.divf %14, %15 : vector<8x128xf32>
    %17 = arith.mulf %16, %0 : vector<8x128xf32>
    %18 = arith.truncf %17 : vector<8x128xf32> to vector<8x128xbf16>
    %c0_7 = arith.constant 0 : index
    %c0_8 = arith.constant 0 : index
    %19 = vector.load %arg4[%c0_7, %c0_8] : memref<128x128xbf16, #tpu.memory_space<vmem>>, vector<128x128xbf16>
    %cst_9 = arith.constant dense<0.000000e+00> : vector<8x128xf32>
    %20 = tpu.matmul %18, %19, %cst_9 {dimension_numbers = #tpu.dot_dimension_numbers<[1], [0], [0], [1], [0, 0, 1, 1], [], []>} : vector<8x128xbf16>, vector<128x128xbf16>, vector<8x128xf32> -> vector<8x128xf32>
    %c0_10 = arith.constant 0 : index
    %c0_11 = arith.constant 0 : index
    %21 = vector.load %arg5[%c0_10, %c0_11] : memref<1x128xf32, #tpu.memory_space<vmem>>, vector<1x128xf32>
    %22 = vector.broadcast %21 : vector<1x128xf32> to vector<8x128xf32>
    %23 = arith.addf %20, %22 : vector<8x128xf32>
    %cst_12 = arith.constant 0.000000e+00 : f32
    %24 = vector.broadcast %cst_12 : f32 to vector<8x128xf32>
    %25 = arith.maximumf %23, %24 : vector<8x128xf32>
    %26 = arith.negf %25 : vector<8x128xf32>
    %27 = math.exp %26 : vector<8x128xf32>
    %cst_13 = arith.constant 1.000000e+00 : f32
    %28 = vector.broadcast %cst_13 : f32 to vector<8x128xf32>
    %29 = arith.addf %28, %27 : vector<8x128xf32>
    %30 = arith.divf %28, %29 : vector<8x128xf32>
    %31 = arith.mulf %30, %17 : vector<8x128xf32>
    %32 = arith.addf %0, %31 : vector<8x128xf32>
    %33 = arith.truncf %32 : vector<8x128xf32> to vector<8x128xbf16>
    %c0_14 = arith.constant 0 : index
    %c0_15 = arith.constant 0 : index
    %34 = vector.load %arg6[%c0_14, %c0_15] : memref<128x128xbf16, #tpu.memory_space<vmem>>, vector<128x128xbf16>
    %cst_16 = arith.constant dense<0.000000e+00> : vector<8x128xf32>
    %35 = tpu.matmul %33, %34, %cst_16 {dimension_numbers = #tpu.dot_dimension_numbers<[1], [0], [0], [1], [0, 0, 1, 1], [], []>} : vector<8x128xbf16>, vector<128x128xbf16>, vector<8x128xf32> -> vector<8x128xf32>
    %c0_17 = arith.constant 0 : index
    %c0_18 = arith.constant 0 : index
    %36 = vector.load %arg7[%c0_17, %c0_18] : memref<1x128xf32, #tpu.memory_space<vmem>>, vector<1x128xf32>
    %37 = vector.broadcast %36 : vector<1x128xf32> to vector<8x128xf32>
    %38 = arith.addf %35, %37 : vector<8x128xf32>
    %c0_19 = arith.constant 0 : index
    %c0_20 = arith.constant 0 : index
    %39 = vector.load %arg8[%c0_19, %c0_20] : memref<8x128xf32, #tpu.memory_space<vmem>>, vector<8x128xf32>
    tpu.vector_store %arg8[%c0_19, %c0_20], %38 {strides = array<i32>} : memref<8x128xf32, #tpu.memory_space<vmem>>, vector<8x128xf32>,
    return
  }
  func.func @transform_0(%arg0: i32) -> (i32, i32) {
    %c0_i32 = arith.constant 0 : i32
    %c0_i32_0 = arith.constant 0 : i32
    return %arg0, %c0_i32 : i32, i32
  }
  func.func @transform_1(%arg0: i32) -> (i32, i32) {
    %c0_i32 = arith.constant 0 : i32
    %c0_i32_0 = arith.constant 0 : i32
    %c0_i32_1 = arith.constant 0 : i32
    return %c0_i32, %c0_i32_0 : i32, i32
  }
  func.func @transform_2(%arg0: i32) -> (i32, i32) {
    %c0_i32 = arith.constant 0 : i32
    %c0_i32_0 = arith.constant 0 : i32
    %c0_i32_1 = arith.constant 0 : i32
    return %c0_i32, %c0_i32_0 : i32, i32
  }
  func.func @transform_3(%arg0: i32) -> (i32, i32) {
    %c0_i32 = arith.constant 0 : i32
    %c0_i32_0 = arith.constant 0 : i32
    %c0_i32_1 = arith.constant 0 : i32
    return %c0_i32, %c0_i32_0 : i32, i32
  }
  func.func @transform_4(%arg0: i32) -> (i32, i32) {
    %c0_i32 = arith.constant 0 : i32
    %c0_i32_0 = arith.constant 0 : i32
    %c0_i32_1 = arith.constant 0 : i32
    return %c0_i32, %c0_i32_0 : i32, i32
  }
  func.func @transform_5(%arg0: i32) -> (i32, i32) {
    %c0_i32 = arith.constant 0 : i32
    %c0_i32_0 = arith.constant 0 : i32
    %c0_i32_1 = arith.constant 0 : i32
    return %c0_i32, %c0_i32_0 : i32, i32
  }
  func.func @transform_6(%arg0: i32) -> (i32, i32) {
    %c0_i32 = arith.constant 0 : i32
    %c0_i32_0 = arith.constant 0 : i32
    %c0_i32_1 = arith.constant 0 : i32
    return %c0_i32, %c0_i32_0 : i32, i32
  }
  func.func @transform_7(%arg0: i32) -> (i32, i32) {
    %c0_i32 = arith.constant 0 : i32
    %c0_i32_0 = arith.constant 0 : i32
    return %arg0, %c0_i32 : i32, i32
  }
}

module attributes {stable_mosaic.version = 11 : i64} {
  func.func @attention_block_kernel(%arg0: i32, %arg1: memref<8x128xf32, #tpu.memory_space<vmem>>, %arg2: memref<128x256xbf16, #tpu.memory_space<vmem>>, %arg3: memref<1x256xf32, #tpu.memory_space<vmem>>, %arg4: memref<128x128xbf16, #tpu.memory_space<vmem>>, %arg5: memref<1x128xf32, #tpu.memory_space<vmem>>, %arg6: memref<128x128xbf16, #tpu.memory_space<vmem>>, %arg7: memref<1x128xf32, #tpu.memory_space<vmem>>, %arg8: memref<8x128xf32, #tpu.memory_space<vmem>>) attributes {dimension_semantics = [#tpu.dimension_semantics<parallel>], iteration_bounds = array<i64: 1>, scalar_prefetch = 0 : i64, scratch_operands = 0 : i64, tpu.core_type = #tpu.core_type<tc>, window_params = [{transform_indices = @transform_0, window_bounds = array<i64: 8, 128>}, {pipeline_mode = #tpu.pipeline_mode<synchronous>, transform_indices = @transform_1, window_bounds = array<i64: 128, 256>}, {pipeline_mode = #tpu.pipeline_mode<synchronous>, transform_indices = @transform_2, window_bounds = array<i64: 1, 256>}, {pipeline_mode = #tpu.pipeline_mode<synchronous>, transform_indices = @transform_3, window_bounds = array<i64: 128, 128>}, {pipeline_mode = #tpu.pipeline_mode<synchronous>, transform_indices = @transform_4, window_bounds = array<i64: 1, 128>}, {pipeline_mode = #tpu.pipeline_mode<synchronous>, transform_indices = @transform_5, window_bounds = array<i64: 128, 128>}, {pipeline_mode = #tpu.pipeline_mode<synchronous>, transform_indices = @transform_6, window_bounds = array<i64: 1, 128>}, {transform_indices = @transform_7, window_bounds = array<i64: 8, 128>}]} {
    %c0 = arith.constant 0 : index
    %c0_0 = arith.constant 0 : index
    %0 = vector.load %arg1[%c0, %c0_0] : memref<8x128xf32, #tpu.memory_space<vmem>>, vector<8x128xf32>
    %1 = arith.truncf %0 : vector<8x128xf32> to vector<8x128xbf16>
    %c0_1 = arith.constant 0 : index
    %c0_2 = arith.constant 0 : index
    %2 = vector.load %arg2[%c0_1, %c0_2] : memref<128x256xbf16, #tpu.memory_space<vmem>>, vector<128x256xbf16>
    %cst = arith.constant dense<0.000000e+00> : vector<8x256xf32>
    %3 = tpu.matmul %1, %2, %cst {dimension_numbers = #tpu.dot_dimension_numbers<[1], [0], [0], [1], [0, 0, 1, 1], [], []>} : vector<8x128xbf16>, vector<128x256xbf16>, vector<8x256xf32> -> vector<8x256xf32>
    %c0_3 = arith.constant 0 : index
    %c0_4 = arith.constant 0 : index
    %4 = vector.load %arg3[%c0_3, %c0_4] : memref<1x256xf32, #tpu.memory_space<vmem>>, vector<1x256xf32>
    %5 = vector.broadcast %4 : vector<1x256xf32> to vector<8x256xf32>
    %6 = arith.addf %3, %5 : vector<8x256xf32>
    %cst_5 = arith.constant 0.000000e+00 : f32
    %7 = vector.broadcast %cst_5 : f32 to vector<8x256xf32>
    %8 = arith.maximumf %6, %7 : vector<8x256xf32>
    %9 = vector.extract_strided_slice %8 {offsets = [0, 0], sizes = [8, 128], strides = [1, 1]} : vector<8x256xf32> to vector<8x128xf32>
    %10 = vector.extract_strided_slice %8 {offsets = [0, 128], sizes = [8, 128], strides = [1, 1]} : vector<8x256xf32> to vector<8x128xf32>
    %11 = arith.addf %9, %10 : vector<8x128xf32>
    %12 = arith.negf %11 : vector<8x128xf32>
    %13 = math.exp %12 : vector<8x128xf32>
    %cst_6 = arith.constant 1.000000e+00 : f32
    %14 = vector.broadcast %cst_6 : f32 to vector<8x128xf32>
    %15 = arith.addf %14, %13 : vector<8x128xf32>
    %16 = arith.divf %14, %15 : vector<8x128xf32>
    %17 = arith.mulf %16, %0 : vector<8x128xf32>
    %18 = arith.truncf %17 : vector<8x128xf32> to vector<8x128xbf16>
    %c0_7 = arith.constant 0 : index
    %c0_8 = arith.constant 0 : index
    %19 = vector.load %arg4[%c0_7, %c0_8] : memref<128x128xbf16, #tpu.memory_space<vmem>>, vector<128x128xbf16>
    %cst_9 = arith.constant dense<0.000000e+00> : vector<8x128xf32>
    %20 = tpu.matmul %18, %19, %cst_9 {dimension_numbers = #tpu.dot_dimension_numbers<[1], [0], [0], [1], [0, 0, 1, 1], [], []>} : vector<8x128xbf16>, vector<128x128xbf16>, vector<8x128xf32> -> vector<8x128xf32>
    %c0_10 = arith.constant 0 : index
    %c0_11 = arith.constant 0 : index
    %21 = vector.load %arg5[%c0_10, %c0_11] : memref<1x128xf32, #tpu.memory_space<vmem>>, vector<1x128xf32>
    %22 = vector.broadcast %21 : vector<1x128xf32> to vector<8x128xf32>
    %23 = arith.addf %20, %22 : vector<8x128xf32>
    %cst_12 = arith.constant 0.000000e+00 : f32
    %24 = vector.broadcast %cst_12 : f32 to vector<8x128xf32>
    %25 = arith.maximumf %23, %24 : vector<8x128xf32>
    %26 = arith.negf %25 : vector<8x128xf32>
    %27 = math.exp %26 : vector<8x128xf32>
    %cst_13 = arith.constant 1.000000e+00 : f32
    %28 = vector.broadcast %cst_13 : f32 to vector<8x128xf32>
    %29 = arith.addf %28, %27 : vector<8x128xf32>
    %30 = arith.divf %28, %29 : vector<8x128xf32>
    %31 = arith.mulf %30, %17 : vector<8x128xf32>
    %32 = arith.addf %0, %31 : vector<8x128xf32>
    %33 = arith.truncf %32 : vector<8x128xf32> to vector<8x128xbf16>
    %c0_14 = arith.constant 0 : index
    %c0_15 = arith.constant 0 : index
    %34 = vector.load %arg6[%c0_14, %c0_15] : memref<128x128xbf16, #tpu.memory_space<vmem>>, vector<128x128xbf16>
    %cst_16 = arith.constant dense<0.000000e+00> : vector<8x128xf32>
    %35 = tpu.matmul %33, %34, %cst_16 {dimension_numbers = #tpu.dot_dimension_numbers<[1], [0], [0], [1], [0, 0, 1, 1], [], []>} : vector<8x128xbf16>, vector<128x128xbf16>, vector<8x128xf32> -> vector<8x128xf32>
    %c0_17 = arith.constant 0 : index
    %c0_18 = arith.constant 0 : index
    %36 = vector.load %arg7[%c0_17, %c0_18] : memref<1x128xf32, #tpu.memory_space<vmem>>, vector<1x128xf32>
    %37 = vector.broadcast %36 : vector<1x128xf32> to vector<8x128xf32>
    %38 = arith.addf %35, %37 : vector<8x128xf32>
    %c0_19 = arith.constant 0 : index
    %c0_20 = arith.constant 0 : index
    %39 = vector.load %arg8[%c0_19, %c0_20] : memref<8x128xf32, #tpu.memory_space<vmem>>, vector<8x128xf32>
    tpu.vector_store %arg8[%c0_19, %c0_20], %38 {strides = array<i32>} : memref<8x128xf32, #tpu.memory_space<vmem>>, vector<8x128xf32>,
    return
  }
  func.func @transform_0(%arg0: i32) -> (i32, i32) {
    %c0_i32 = arith.constant 0 : i32
    %c0_i32_0 = arith.constant 0 : i32
    return %arg0, %c0_i32 : i32, i32
  }
  func.func @transform_1(%arg0: i32) -> (i32, i32) {
    %c0_i32 = arith.constant 0 : i32
    %c0_i32_0 = arith.constant 0 : i32
    %c0_i32_1 = arith.constant 0 : i32
    return %c0_i32, %c0_i32_0 : i32, i32
  }
  func.func @transform_2(%arg0: i32) -> (i32, i32) {
    %c0_i32 = arith.constant 0 : i32
    %c0_i32_0 = arith.constant 0 : i32
    %c0_i32_1 = arith.constant 0 : i32
    return %c0_i32, %c0_i32_0 : i32, i32
  }
  func.func @transform_3(%arg0: i32) -> (i32, i32) {
    %c0_i32 = arith.constant 0 : i32
    %c0_i32_0 = arith.constant 0 : i32
    %c0_i32_1 = arith.constant 0 : i32
    return %c0_i32, %c0_i32_0 : i32, i32
  }
  func.func @transform_4(%arg0: i32) -> (i32, i32) {
    %c0_i32 = arith.constant 0 : i32
    %c0_i32_0 = arith.constant 0 : i32
    %c0_i32_1 = arith.constant 0 : i32
    return %c0_i32, %c0_i32_0 : i32, i32
  }
  func.func @transform_5(%arg0: i32) -> (i32, i32) {
    %c0_i32 = arith.constant 0 : i32
    %c0_i32_0 = arith.constant 0 : i32
    %c0_i32_1 = arith.constant 0 : i32
    return %c0_i32, %c0_i32_0 : i32, i32
  }
  func.func @transform_6(%arg0: i32) -> (i32, i32) {
    %c0_i32 = arith.constant 0 : i32
    %c0_i32_0 = arith.constant 0 : i32
    %c0_i32_1 = arith.constant 0 : i32
    return %c0_i32, %c0_i32_0 : i32, i32
  }
  func.func @transform_7(%arg0: i32) -> (i32, i32) {
    %c0_i32 = arith.constant 0 : i32
    %c0_i32_0 = arith.constant 0 : i32
    return %arg0, %c0_i32 : i32, i32
  }
}

</mosaic_0001>

<llo_original>
// kernel: tpu_custom_call.1
$region0: #{tpu_custom_call.1}
  #allocation0 [shape = 'u32[]', space=smem, size = 0x4, offset = 0x4, fixed_abs, tag = 'smem constant byte address 0x4 - core index']
  #allocation1 [shape = 'u32[144,128]{1,0:T(1,128)}', space=vmem, size = 0x12000, scoped, tag = 'internal scratch']
  %s0 = inlined_call_operand.hbm [shape: f32[8,128], index: 0, kind: input, shape index: {}]
  %s1 = inlined_call_operand.hbm [shape: bf16[128,256], index: 1, kind: input, shape index: {}]
  %s2 = inlined_call_operand.vmem [shape: f32[1,256], index: 2, kind: input, shape index: {}]
  %s3 = inlined_call_operand.hbm [shape: bf16[128,128], index: 3, kind: input, shape index: {}]
  %s4 = inlined_call_operand.vmem [shape: f32[1,128], index: 4, kind: input, shape index: {}]
  %s5 = inlined_call_operand.hbm [shape: bf16[128,128], index: 5, kind: input, shape index: {}]
  %s6 = inlined_call_operand.vmem [shape: f32[1,128], index: 6, kind: input, shape index: {}]
  %s7 = inlined_call_operand.hbm [shape: f32[8,128], index: 7, kind: output, shape index: {}]
  %s8 = sld [smem:[#allocation0]]
  $region54: #{tpu_custom_call.1} parent=0
    _
  %s10 = ssub.s32 1, %s8
  %s11 = scalar_select 0, %s10, %s8
  $region1: #{tpu_custom_call.1} parent=0
    #allocation2 [shape = 'u8[4096]{0}', space=vmem, size = 0x1000, scoped, tag = 'input window, operand 0, single buffered']
    #allocation3 [shape = 's32[1]{0}', space=sflag, size = 0x4, scoped, tag = 'scoped memory for tpu_custom_call.1']
    #allocation4 [shape = 's32[1]{0}', space=sflag, size = 0x4, scoped, tag = 'scoped memory for tpu_custom_call.1']
    #allocation5 [shape = 'u8[65536]{0}', space=vmem, size = 0x10000, scoped, tag = 'input window, operand 1, single buffered']
    #allocation6 [shape = 's32[1]{0}', space=sflag, size = 0x4, scoped, tag = 'scoped memory for tpu_custom_call.1']
    #allocation7 [shape = 'u8[32768]{0}', space=vmem, size = 0x8000, scoped, tag = 'input window, operand 3, single buffered']
    #allocation8 [shape = 'u8[32768]{0}', space=vmem, size = 0x8000, scoped, tag = 'input window, operand 5, single buffered']
    #allocation9 [shape = 's32[1]{0}', space=sflag, size = 0x4, scoped, tag = 'scoped memory for tpu_custom_call.1']
    #allocation10 [shape = 'u8[4096]{0}', space=vmem, size = 0x1000, scoped, tag = 'output window, operand 0, single buffered']
    %12 = vsyncpa [#allocation3], 0
    %13 = vsyncpa [#allocation6], 0
    %14 = vsyncpa [#allocation9], 0
    %15 = vsyncpa [#allocation4], 0
    // Predicated region
    $region2: #{tpu_custom_call.1} parent=1 // pred_check
      _
    $region3: #{tpu_custom_call.1} parent=1 // pred_check_branch
      %17 = sbr.rel (0) target = $region5
    $region4: #{tpu_custom_call.1} parent=1 // pred_region
      %s19 = ssub.s32 128, 128
      %20 = vsyncadd [#allocation3], %s19
      %s22 = sshll.u32 [#allocation2], 4
      %s23 = int_to_ptr.vmem [resolvable:$true] %s22
      %25 = dma.hbm_to_vmem [thread:$0]  %s0, 128, %s23, [#allocation3]
    $region5: #{tpu_custom_call.1} parent=1 // pred_fallthru
      _
    // Predicated region
    $region6: #{tpu_custom_call.1} parent=1 // pred_check
      _
    $region7: #{tpu_custom_call.1} parent=1 // pred_check_branch
      %27 = sbr.rel (0) target = $region9
    $region8: #{tpu_custom_call.1} parent=1 // pred_region
      %s29 = ssub.s32 2048, 2048
      %30 = vsyncadd [#allocation6], %s29
      %s31 = sshll.u32 [#allocation5], 4
      %s32 = int_to_ptr.vmem [resolvable:$true] %s31
      %37 = dma.hbm_to_vmem [thread:$0]  %s1, 2048, %s32, [#allocation6], 128, 128, 8
    $region9: #{tpu_custom_call.1} parent=1 // pred_fallthru
      _
    // Predicated region
    $region10: #{tpu_custom_call.1} parent=1 // pred_check
      _
    $region11: #{tpu_custom_call.1} parent=1 // pred_check_branch
      %39 = sbr.rel (0) target = $region13
    $region12: #{tpu_custom_call.1} parent=1 // pred_region
      _
    $region13: #{tpu_custom_call.1} parent=1 // pred_fallthru
      _
    // Predicated region
    $region14: #{tpu_custom_call.1} parent=1 // pred_check
      _
    $region15: #{tpu_custom_call.1} parent=1 // pred_check_branch
      %41 = sbr.rel (0) target = $region17
    $region16: #{tpu_custom_call.1} parent=1 // pred_region
      %s43 = ssub.s32 1024, 1024
      %44 = vsyncadd [#allocation6], %s43
      %s45 = sshll.u32 [#allocation7], 4
      %s46 = int_to_ptr.vmem [resolvable:$true] %s45
      %51 = dma.hbm_to_vmem [thread:$0]  %s3, 1024, %s46, [#allocation6], 64, 64, 4
    $region17: #{tpu_custom_call.1} parent=1 // pred_fallthru
      _
    // Predicated region
    $region18: #{tpu_custom_call.1} parent=1 // pred_check
      _
    $region19: #{tpu_custom_call.1} parent=1 // pred_check_branch
      %53 = sbr.rel (0) target = $region21
    $region20: #{tpu_custom_call.1} parent=1 // pred_region
      _
    $region21: #{tpu_custom_call.1} parent=1 // pred_fallthru
      _
    // Predicated region
    $region22: #{tpu_custom_call.1} parent=1 // pred_check
      _
    $region23: #{tpu_custom_call.1} parent=1 // pred_check_branch
      %55 = sbr.rel (0) target = $region25
    $region24: #{tpu_custom_call.1} parent=1 // pred_region
      %s57 = ssub.s32 1024, 1024
      %58 = vsyncadd [#allocation9], %s57
      %s59 = sshll.u32 [#allocation8], 4
      %s60 = int_to_ptr.vmem [resolvable:$true] %s59
      %65 = dma.hbm_to_vmem [thread:$0]  %s5, 1024, %s60, [#allocation9], 64, 64, 4
    $region25: #{tpu_custom_call.1} parent=1 // pred_fallthru
      _
    // Predicated region
    $region26: #{tpu_custom_call.1} parent=1 // pred_check
      _
    $region27: #{tpu_custom_call.1} parent=1 // pred_check_branch
      %67 = sbr.rel (0) target = $region29
    $region28: #{tpu_custom_call.1} parent=1 // pred_region
      _
    $region29: #{tpu_custom_call.1} parent=1 // pred_fallthru
      _
    // Predicated region
    $region30: #{tpu_custom_call.1} parent=1 // pred_check
      _
    $region31: #{tpu_custom_call.1} parent=1 // pred_check_branch
      %69 = sbr.rel (0) target = $region33
    $region32: #{tpu_custom_call.1} parent=1 // pred_region
      %70 = dma.done [#allocation3], 128
    $region33: #{tpu_custom_call.1} parent=1 // pred_fallthru
      _
    // Predicated region
    $region34: #{tpu_custom_call.1} parent=1 // pred_check
      _
    $region35: #{tpu_custom_call.1} parent=1 // pred_check_branch
      %72 = sbr.rel (0) target = $region37
    $region36: #{tpu_custom_call.1} parent=1 // pred_region
      %73 = dma.done [#allocation6], 2048
    $region37: #{tpu_custom_call.1} parent=1 // pred_fallthru
      _
    // Predicated region
    $region38: #{tpu_custom_call.1} parent=1 // pred_check
      _
    $region39: #{tpu_custom_call.1} parent=1 // pred_check_branch
      %75 = sbr.rel (0) target = $region41
    $region40: #{tpu_custom_call.1} parent=1 // pred_region
      %76 = dma.done [#allocation6], 1024
    $region41: #{tpu_custom_call.1} parent=1 // pred_fallthru
      _
    // Predicated region
    $region42: #{tpu_custom_call.1} parent=1 // pred_check
      _
    $region43: #{tpu_custom_call.1} parent=1 // pred_check_branch
      %78 = sbr.rel (0) target = $region45
    $region44: #{tpu_custom_call.1} parent=1 // pred_region
      %79 = dma.done [#allocation9], 1024
    $region45: #{tpu_custom_call.1} parent=1 // pred_fallthru
      _
    %v81 = vld [vmem:[#allocation2] sm:$0xff]
    %v82 = vpack.c.bf16 %v81, %v81
    %v83 = vld [vmem:[#allocation5] sm:$0xff]
    %v84 = vld [vmem:[#allocation5 + $0x8] sm:$0xff]
    %v85 = vld [vmem:[#allocation5 + $0x10] sm:$0xff]
    %v86 = vld [vmem:[#allocation5 + $0x18] sm:$0xff]
    %v87 = vld [vmem:[#allocation5 + $0x20] sm:$0xff]
    %v88 = vld [vmem:[#allocation5 + $0x28] sm:$0xff]
    %v89 = vld [vmem:[#allocation5 + $0x30] sm:$0xff]
    %v90 = vld [vmem:[#allocation5 + $0x38] sm:$0xff]
    %v91 = vld [vmem:[#allocation5 + $0x40] sm:$0xff]
    %v92 = vld [vmem:[#allocation5 + $0x48] sm:$0xff]
    %v93 = vld [vmem:[#allocation5 + $0x50] sm:$0xff]
    %v94 = vld [vmem:[#allocation5 + $0x58] sm:$0xff]
    %v95 = vld [vmem:[#allocation5 + $0x60] sm:$0xff]
    %v96 = vld [vmem:[#allocation5 + $0x68] sm:$0xff]
    %v97 = vld [vmem:[#allocation5 + $0x70] sm:$0xff]
    %v98 = vld [vmem:[#allocation5 + $0x78] sm:$0xff]
    %v99 = vld [vmem:[%s2] sm:$0x3]
    %v101 = vlaneseq
    %v102 = vshrl.u32 %v101, 7
    %v103 = vsub.s32 0, %v102
    %v104 = vrot.slane %v99, %v103
    %v105 = vlaneseq
    %v106 = vshrl.u32 %v105, 7
    %v107 = vsub.s32 1, %v106
    %v108 = vrot.slane %v99, %v107
    %v127 = vunpack.c.l.b16 %v83
    %v128 = vunpack.c.h.b16 %v83
    %v129 = vunpack.c.l.b16 %v84
    %v130 = vunpack.c.h.b16 %v84
    %v131 = vunpack.c.l.b16 %v85
    %v132 = vunpack.c.h.b16 %v85
    %v133 = vunpack.c.l.b16 %v86
    %v134 = vunpack.c.h.b16 %v86
    %v135 = vunpack.c.l.b16 %v87
    %v136 = vunpack.c.h.b16 %v87
    %v137 = vunpack.c.l.b16 %v88
    %v138 = vunpack.c.h.b16 %v88
    %v139 = vunpack.c.l.b16 %v89
    %v140 = vunpack.c.h.b16 %v89
    %v141 = vunpack.c.l.b16 %v90
    %v142 = vunpack.c.h.b16 %v90
    %v143 = vunpack.c.l.b16 %v91
    %v144 = vunpack.c.h.b16 %v91
    %v145 = vunpack.c.l.b16 %v92
    %v146 = vunpack.c.h.b16 %v92
    %v147 = vunpack.c.l.b16 %v93
    %v148 = vunpack.c.h.b16 %v93
    %v149 = vunpack.c.l.b16 %v94
    %v150 = vunpack.c.h.b16 %v94
    %v151 = vunpack.c.l.b16 %v95
    %v152 = vunpack.c.h.b16 %v95
    %v153 = vunpack.c.l.b16 %v96
    %v154 = vunpack.c.h.b16 %v96
    %v155 = vunpack.c.l.b16 %v97
    %v156 = vunpack.c.h.b16 %v97
    %v157 = vunpack.c.l.b16 %v98
    %v158 = vunpack.c.h.b16 %v98
    %v159 = vpack.c.b16 %v129, %v127
    %v160 = vpack.c.b16 %v130, %v128
    %v161 = vpack.c.b16 %v133, %v131
    %v162 = vpack.c.b16 %v134, %v132
    %v163 = vpack.c.b16 %v137, %v135
    %v164 = vpack.c.b16 %v138, %v136
    %v165 = vpack.c.b16 %v141, %v139
    %v166 = vpack.c.b16 %v142, %v140
    %v167 = vpack.c.b16 %v145, %v143
    %v168 = vpack.c.b16 %v146, %v144
    %v169 = vpack.c.b16 %v149, %v147
    %v170 = vpack.c.b16 %v150, %v148
    %v171 = vpack.c.b16 %v153, %v151
    %v172 = vpack.c.b16 %v154, %v152
    %v173 = vpack.c.b16 %v157, %v155
    %v174 = vpack.c.b16 %v158, %v156
    %191 = vmatprep.subr.bf16.mxu0 %v160
    %192 = vmatpush1.bf16.msra.mxu0 %v159
    %193 = vmatprep.subr.bf16.mxu0 %v162
    %194 = vmatpush1.bf16.msra.mxu0 %v161
    %195 = vmatprep.subr.bf16.mxu0 %v164
    %196 = vmatpush1.bf16.msra.mxu0 %v163
    %197 = vmatprep.subr.bf16.mxu0 %v166
    %198 = vmatpush1.bf16.msra.mxu0 %v165
    %199 = vmatprep.subr.bf16.mxu0 %v168
    %200 = vmatpush1.bf16.msra.mxu0 %v167
    %201 = vmatprep.subr.bf16.mxu0 %v170
    %202 = vmatpush1.bf16.msra.mxu0 %v169
    %203 = vmatprep.subr.bf16.mxu0 %v172
    %204 = vmatpush1.bf16.msra.mxu0 %v171
    %205 = vmatprep.subr.bf16.mxu0 %v174
    %206 = vmatpush1.bf16.msra.mxu0 %v173
    %207 = vmatprep.subr.bf16.mxu0 0
    %208 = vmatpush1.bf16.msra.mxu0 0
    %209 = vmatprep.subr.bf16.mxu0 0
    %210 = vmatpush1.bf16.msra.mxu0 0
    %211 = vmatprep.subr.bf16.mxu0 0
    %212 = vmatpush1.bf16.msra.mxu0 0
    %213 = vmatprep.subr.bf16.mxu0 0
    %214 = vmatpush1.bf16.msra.mxu0 0
    %215 = vmatprep.subr.bf16.mxu0 0
    %216 = vmatpush1.bf16.msra.mxu0 0
    %217 = vmatprep.subr.bf16.mxu0 0
    %218 = vmatpush1.bf16.msra.mxu0 0
    %219 = vmatprep.subr.bf16.mxu0 0
    %220 = vmatpush1.bf16.msra.mxu0 0
    %221 = vmatprep.subr.bf16.mxu0 0
    %222 = vmatpush1.bf16.msra.mxu0 0
    %223 = vmatprep.mubr.bf16.mxu0 0
    %224 = vmatmul.mubr.bf16.gmra.mrb[0].mxu0 %v82
    %v225 = vpop.f32.mrb[0].mxu0
    %v226 = vadd.f32 %v104, %v225
    %v227 = vpop.f32.mrb[0].mxu0
    %v228 = vadd.f32 %v108, %v227
    %v229 = vpop.f32.mrb[0].mxu0
    %v230 = vpop.f32.mrb[0].mxu0
    %231 = vdwg.mxu0
    %v232 = vmax.f32 %v226, 0.0
    %v233 = vmax.f32 %v228, 0.0
    %v234 = vadd.f32 %v232, %v233
    %v235 = vxor.u32 %v234, 2147483648
    %v236 = vmul.f32 %v235, 1.442695
    %v237 = vpow.pop %v236
    %v238 = vadd.f32 %v237, 1.0
    %v239 = vrcp.pop %v238
    %v240 = vmul.f32 1.0, %v239
    %v241 = vmul.f32 %v240, %v81
    %v242 = vpack.c.bf16 %v241, %v241
    %v243 = vld [vmem:[#allocation7] sm:$0xf]
    %v244 = vld [vmem:[#allocation7 + $0x4] sm:$0xf]
    %v245 = vld [vmem:[#allocation7 + $0x8] sm:$0xf]
    %v246 = vld [vmem:[#allocation7 + $0xc] sm:$0xf]
    %v247 = vld [vmem:[#allocation7 + $0x10] sm:$0xf]
    %v248 = vld [vmem:[#allocation7 + $0x14] sm:$0xf]
    %v249 = vld [vmem:[#allocation7 + $0x18] sm:$0xf]
    %v250 = vld [vmem:[#allocation7 + $0x1c] sm:$0xf]
    %v251 = vld [vmem:[#allocation7 + $0x20] sm:$0xf]
    %v252 = vld [vmem:[#allocation7 + $0x24] sm:$0xf]
    %v253 = vld [vmem:[#allocation7 + $0x28] sm:$0xf]
    %v254 = vld [vmem:[#allocation7 + $0x2c] sm:$0xf]
    %v255 = vld [vmem:[#allocation7 + $0x30] sm:$0xf]
    %v256 = vld [vmem:[#allocation7 + $0x34] sm:$0xf]
    %v257 = vld [vmem:[#allocation7 + $0x38] sm:$0xf]
    %v258 = vld [vmem:[#allocation7 + $0x3c] sm:$0xf]
    %v259 = vld [vmem:[%s4] sm:$0x1]
    %v261 = vlaneseq
    %v262 = vshrl.u32 %v261, 7
    %v263 = vsub.s32 0, %v262
    %v264 = vrot.slane %v259, %v263
    %v282 = vunpack.c.l.b16 %v243
    %v283 = vunpack.c.l.b16 %v244
    %v284 = vunpack.c.l.b16 %v245
    %v285 = vunpack.c.l.b16 %v246
    %v286 = vunpack.c.l.b16 %v247
    %v287 = vunpack.c.l.b16 %v248
    %v288 = vunpack.c.l.b16 %v249
    %v289 = vunpack.c.l.b16 %v250
    %v290 = vunpack.c.l.b16 %v251
    %v291 = vunpack.c.l.b16 %v252
    %v292 = vunpack.c.l.b16 %v253
    %v293 = vunpack.c.l.b16 %v254
    %v294 = vunpack.c.l.b16 %v255
    %v295 = vunpack.c.l.b16 %v256
    %v296 = vunpack.c.l.b16 %v257
    %v297 = vunpack.c.l.b16 %v258
    %v298 = vpack.c.b16 %v283, %v282
    %v299 = vpack.c.b16 %v285, %v284
    %v300 = vpack.c.b16 %v287, %v286
    %v301 = vpack.c.b16 %v289, %v288
    %v302 = vpack.c.b16 %v291, %v290
    %v303 = vpack.c.b16 %v293, %v292
    %v304 = vpack.c.b16 %v295, %v294
    %v305 = vpack.c.b16 %v297, %v296
    %314 = vmatprep.subr.bf16.mxu0 0
    %315 = vmatpush1.bf16.msra.mxu0 %v298
    %316 = vmatprep.subr.bf16.mxu0 0
    %317 = vmatpush1.bf16.msra.mxu0 %v299
    %318 = vmatprep.subr.bf16.mxu0 0
    %319 = vmatpush1.bf16.msra.mxu0 %v300
    %320 = vmatprep.subr.bf16.mxu0 0
    %321 = vmatpush1.bf16.msra.mxu0 %v301
    %322 = vmatprep.subr.bf16.mxu0 0
    %323 = vmatpush1.bf16.msra.mxu0 %v302
    %324 = vmatprep.subr.bf16.mxu0 0
    %325 = vmatpush1.bf16.msra.mxu0 %v303
    %326 = vmatprep.subr.bf16.mxu0 0
    %327 = vmatpush1.bf16.msra.mxu0 %v304
    %328 = vmatprep.subr.bf16.mxu0 0
    %329 = vmatpush1.bf16.msra.mxu0 %v305
    %330 = vmatprep.subr.bf16.mxu0 0
    %331 = vmatpush1.bf16.msra.mxu0 0
    %332 = vmatprep.subr.bf16.mxu0 0
    %333 = vmatpush1.bf16.msra.mxu0 0
    %334 = vmatprep.subr.bf16.mxu0 0
    %335 = vmatpush1.bf16.msra.mxu0 0
    %336 = vmatprep.subr.bf16.mxu0 0
    %337 = vmatpush1.bf16.msra.mxu0 0
    %338 = vmatprep.subr.bf16.mxu0 0
    %339 = vmatpush1.bf16.msra.mxu0 0
    %340 = vmatprep.subr.bf16.mxu0 0
    %341 = vmatpush1.bf16.msra.mxu0 0
    %342 = vmatprep.subr.bf16.mxu0 0
    %343 = vmatpush1.bf16.msra.mxu0 0
    %344 = vmatprep.subr.bf16.mxu0 0
    %345 = vmatpush1.bf16.msra.mxu0 0
    %346 = vmatprep.mubr.bf16.mxu0 0
    %347 = vmatmul.mubr.bf16.gmra.mrb[0].mxu0 %v242
    %v348 = vpop.f32.mrb[0].mxu0
    %v349 = vadd.f32 %v264, %v348
    %v350 = vpop.f32.mrb[0].mxu0
    %v351 = vpop.f32.mrb[0].mxu0
    %v352 = vpop.f32.mrb[0].mxu0
    %353 = vdwg.mxu0
    %v354 = vmax.f32 %v349, 0.0
    %v355 = vxor.u32 %v354, 2147483648
    %v356 = vmul.f32 %v355, 1.442695
    %v357 = vpow.pop %v356
    %v358 = vadd.f32 %v357, 1.0
    %v359 = vrcp.pop %v358
    %v360 = vmul.f32 1.0, %v359
    %v361 = vmul.f32 %v360, %v241
    %v362 = vadd.f32 %v81, %v361
    %v363 = vpack.c.bf16 %v362, %v362
    %v364 = vld [vmem:[#allocation8] sm:$0xf]
    %v365 = vld [vmem:[#allocation8 + $0x4] sm:$0xf]
    %v366 = vld [vmem:[#allocation8 + $0x8] sm:$0xf]
    %v367 = vld [vmem:[#allocation8 + $0xc] sm:$0xf]
    %v368 = vld [vmem:[#allocation8 + $0x10] sm:$0xf]
    %v369 = vld [vmem:[#allocation8 + $0x14] sm:$0xf]
    %v370 = vld [vmem:[#allocation8 + $0x18] sm:$0xf]
    %v371 = vld [vmem:[#allocation8 + $0x1c] sm:$0xf]
    %v372 = vld [vmem:[#allocation8 + $0x20] sm:$0xf]
    %v373 = vld [vmem:[#allocation8 + $0x24] sm:$0xf]
    %v374 = vld [vmem:[#allocation8 + $0x28] sm:$0xf]
    %v375 = vld [vmem:[#allocation8 + $0x2c] sm:$0xf]
    %v376 = vld [vmem:[#allocation8 + $0x30] sm:$0xf]
    %v377 = vld [vmem:[#allocation8 + $0x34] sm:$0xf]
    %v378 = vld [vmem:[#allocation8 + $0x38] sm:$0xf]
    %v379 = vld [vmem:[#allocation8 + $0x3c] sm:$0xf]
    %v380 = vld [vmem:[%s6] sm:$0x1]
    %v382 = vlaneseq
    %v383 = vshrl.u32 %v382, 7
    %v384 = vsub.s32 0, %v383
    %v385 = vrot.slane %v380, %v384
    %v403 = vunpack.c.l.b16 %v364
    %v404 = vunpack.c.l.b16 %v365
    %v405 = vunpack.c.l.b16 %v366
    %v406 = vunpack.c.l.b16 %v367
    %v407 = vunpack.c.l.b16 %v368
    %v408 = vunpack.c.l.b16 %v369
    %v409 = vunpack.c.l.b16 %v370
    %v410 = vunpack.c.l.b16 %v371
    %v411 = vunpack.c.l.b16 %v372
    %v412 = vunpack.c.l.b16 %v373
    %v413 = vunpack.c.l.b16 %v374
    %v414 = vunpack.c.l.b16 %v375
    %v415 = vunpack.c.l.b16 %v376
    %v416 = vunpack.c.l.b16 %v377
    %v417 = vunpack.c.l.b16 %v378
    %v418 = vunpack.c.l.b16 %v379
    %v419 = vpack.c.b16 %v404, %v403
    %v420 = vpack.c.b16 %v406, %v405
    %v421 = vpack.c.b16 %v408, %v407
    %v422 = vpack.c.b16 %v410, %v409
    %v423 = vpack.c.b16 %v412, %v411
    %v424 = vpack.c.b16 %v414, %v413
    %v425 = vpack.c.b16 %v416, %v415
    %v426 = vpack.c.b16 %v418, %v417
    %435 = vmatprep.subr.bf16.mxu0 0
    %436 = vmatpush1.bf16.msra.mxu0 %v419
    %437 = vmatprep.subr.bf16.mxu0 0
    %438 = vmatpush1.bf16.msra.mxu0 %v420
    %439 = vmatprep.subr.bf16.mxu0 0
    %440 = vmatpush1.bf16.msra.mxu0 %v421
    %441 = vmatprep.subr.bf16.mxu0 0
    %442 = vmatpush1.bf16.msra.mxu0 %v422
    %443 = vmatprep.subr.bf16.mxu0 0
    %444 = vmatpush1.bf16.msra.mxu0 %v423
    %445 = vmatprep.subr.bf16.mxu0 0
    %446 = vmatpush1.bf16.msra.mxu0 %v424
    %447 = vmatprep.subr.bf16.mxu0 0
    %448 = vmatpush1.bf16.msra.mxu0 %v425
    %449 = vmatprep.subr.bf16.mxu0 0
    %450 = vmatpush1.bf16.msra.mxu0 %v426
    %451 = vmatprep.subr.bf16.mxu0 0
    %452 = vmatpush1.bf16.msra.mxu0 0
    %453 = vmatprep.subr.bf16.mxu0 0
    %454 = vmatpush1.bf16.msra.mxu0 0
    %455 = vmatprep.subr.bf16.mxu0 0
    %456 = vmatpush1.bf16.msra.mxu0 0
    %457 = vmatprep.subr.bf16.mxu0 0
    %458 = vmatpush1.bf16.msra.mxu0 0
    %459 = vmatprep.subr.bf16.mxu0 0
    %460 = vmatpush1.bf16.msra.mxu0 0
    %461 = vmatprep.subr.bf16.mxu0 0
    %462 = vmatpush1.bf16.msra.mxu0 0
    %463 = vmatprep.subr.bf16.mxu0 0
    %464 = vmatpush1.bf16.msra.mxu0 0
    %465 = vmatprep.subr.bf16.mxu0 0
    %466 = vmatpush1.bf16.msra.mxu0 0
    %467 = vmatprep.mubr.bf16.mxu0 0
    %468 = vmatmul.mubr.bf16.gmra.mrb[0].mxu0 %v363
    %v469 = vpop.f32.mrb[0].mxu0
    %v470 = vadd.f32 %v385, %v469
    %v471 = vpop.f32.mrb[0].mxu0
    %v472 = vpop.f32.mrb[0].mxu0
    %v473 = vpop.f32.mrb[0].mxu0
    %474 = vdwg.mxu0
    %475 = vst [vmem:[#allocation10] sm:$0xff] %v470
    // Predicated region
    $region46: #{tpu_custom_call.1} parent=1 // pred_check
      _
    $region47: #{tpu_custom_call.1} parent=1 // pred_check_branch
      %477 = sbr.rel (0) target = $region49
    $region48: #{tpu_custom_call.1} parent=1 // pred_region
      %s479 = ssub.s32 128, 128
      %480 = vsyncadd [#allocation4], %s479
      %s482 = sshll.u32 [#allocation10], 4
      %s483 = int_to_ptr.vmem [resolvable:$true] %s482
      %485 = dma.vmem_to_hbm [thread:$0]  %s483, 128, %s7, [#allocation4]
    $region49: #{tpu_custom_call.1} parent=1 // pred_fallthru
      _
    // Predicated region
    $region50: #{tpu_custom_call.1} parent=1 // pred_check
      _
    $region51: #{tpu_custom_call.1} parent=1 // pred_check_branch
      %487 = sbr.rel (0) target = $region53
    $region52: #{tpu_custom_call.1} parent=1 // pred_region
      %488 = dma.done [#allocation4], 128
    $region53: #{tpu_custom_call.1} parent=1 // pred_fallthru
      _
    %489 = vsyncpa [#allocation3], 1
    %490 = vsyncpa [#allocation6], 1
    %491 = vsyncpa [#allocation9], 1
    %492 = vsyncpa [#allocation4], 1

// kernel: tpu_custom_call.1
$region0: #{tpu_custom_call.1}
  #allocation0 [shape = 'u32[]', space=smem, size = 0x4, offset = 0x4, fixed_abs, tag = 'smem constant byte address 0x4 - core index']
  #allocation1 [shape = 'u32[144,128]{1,0:T(1,128)}', space=vmem, size = 0x12000, scoped, tag = 'internal scratch']
  %s0 = inlined_call_operand.hbm [shape: f32[8,128], index: 0, kind: input, shape index: {}]
  %s1 = inlined_call_operand.hbm [shape: bf16[128,256], index: 1, kind: input, shape index: {}]
  %s2 = inlined_call_operand.vmem [shape: f32[1,256], index: 2, kind: input, shape index: {}]
  %s3 = inlined_call_operand.hbm [shape: bf16[128,128], index: 3, kind: input, shape index: {}]
  %s4 = inlined_call_operand.vmem [shape: f32[1,128], index: 4, kind: input, shape index: {}]
  %s5 = inlined_call_operand.hbm [shape: bf16[128,128], index: 5, kind: input, shape index: {}]
  %s6 = inlined_call_operand.vmem [shape: f32[1,128], index: 6, kind: input, shape index: {}]
  %s7 = inlined_call_operand.hbm [shape: f32[8,128], index: 7, kind: output, shape index: {}]
  %s8 = sld [smem:[#allocation0]]
  $region54: #{tpu_custom_call.1} parent=0
    _
  %s10 = ssub.s32 1, %s8
  %s11 = scalar_select 0, %s10, %s8
  $region1: #{tpu_custom_call.1} parent=0
    #allocation2 [shape = 'u8[4096]{0}', space=vmem, size = 0x1000, scoped, tag = 'input window, operand 0, single buffered']
    #allocation3 [shape = 's32[1]{0}', space=sflag, size = 0x4, scoped, tag = 'scoped memory for tpu_custom_call.1']
    #allocation4 [shape = 's32[1]{0}', space=sflag, size = 0x4, scoped, tag = 'scoped memory for tpu_custom_call.1']
    #allocation5 [shape = 'u8[65536]{0}', space=vmem, size = 0x10000, scoped, tag = 'input window, operand 1, single buffered']
    #allocation6 [shape = 's32[1]{0}', space=sflag, size = 0x4, scoped, tag = 'scoped memory for tpu_custom_call.1']
    #allocation7 [shape = 'u8[32768]{0}', space=vmem, size = 0x8000, scoped, tag = 'input window, operand 3, single buffered']
    #allocation8 [shape = 'u8[32768]{0}', space=vmem, size = 0x8000, scoped, tag = 'input window, operand 5, single buffered']
    #allocation9 [shape = 's32[1]{0}', space=sflag, size = 0x4, scoped, tag = 'scoped memory for tpu_custom_call.1']
    #allocation10 [shape = 'u8[4096]{0}', space=vmem, size = 0x1000, scoped, tag = 'output window, operand 0, single buffered']
    %12 = vsyncpa [#allocation3], 0
    %13 = vsyncpa [#allocation6], 0
    %14 = vsyncpa [#allocation9], 0
    %15 = vsyncpa [#allocation4], 0
    // Predicated region
    $region2: #{tpu_custom_call.1} parent=1 // pred_check
      _
    $region3: #{tpu_custom_call.1} parent=1 // pred_check_branch
      %17 = sbr.rel (0) target = $region5
    $region4: #{tpu_custom_call.1} parent=1 // pred_region
      %s19 = ssub.s32 128, 128
      %20 = vsyncadd [#allocation3], %s19
      %s22 = sshll.u32 [#allocation2], 4
      %s23 = int_to_ptr.vmem [resolvable:$true] %s22
      %25 = dma.hbm_to_vmem [thread:$0]  %s0, 128, %s23, [#allocation3]
    $region5: #{tpu_custom_call.1} parent=1 // pred_fallthru
      _
    // Predicated region
    $region6: #{tpu_custom_call.1} parent=1 // pred_check
      _
    $region7: #{tpu_custom_call.1} parent=1 // pred_check_branch
      %27 = sbr.rel (0) target = $region9
    $region8: #{tpu_custom_call.1} parent=1 // pred_region
      %s29 = ssub.s32 2048, 2048
      %30 = vsyncadd [#allocation6], %s29
      %s31 = sshll.u32 [#allocation5], 4
      %s32 = int_to_ptr.vmem [resolvable:$true] %s31
      %37 = dma.hbm_to_vmem [thread:$0]  %s1, 2048, %s32, [#allocation6], 128, 128, 8
    $region9: #{tpu_custom_call.1} parent=1 // pred_fallthru
      _
    // Predicated region
    $region10: #{tpu_custom_call.1} parent=1 // pred_check
      _
    $region11: #{tpu_custom_call.1} parent=1 // pred_check_branch
      %39 = sbr.rel (0) target = $region13
    $region12: #{tpu_custom_call.1} parent=1 // pred_region
      _
    $region13: #{tpu_custom_call.1} parent=1 // pred_fallthru
      _
    // Predicated region
    $region14: #{tpu_custom_call.1} parent=1 // pred_check
      _
    $region15: #{tpu_custom_call.1} parent=1 // pred_check_branch
      %41 = sbr.rel (0) target = $region17
    $region16: #{tpu_custom_call.1} parent=1 // pred_region
      %s43 = ssub.s32 1024, 1024
      %44 = vsyncadd [#allocation6], %s43
      %s45 = sshll.u32 [#allocation7], 4
      %s46 = int_to_ptr.vmem [resolvable:$true] %s45
      %51 = dma.hbm_to_vmem [thread:$0]  %s3, 1024, %s46, [#allocation6], 64, 64, 4
    $region17: #{tpu_custom_call.1} parent=1 // pred_fallthru
      _
    // Predicated region
    $region18: #{tpu_custom_call.1} parent=1 // pred_check
      _
    $region19: #{tpu_custom_call.1} parent=1 // pred_check_branch
      %53 = sbr.rel (0) target = $region21
    $region20: #{tpu_custom_call.1} parent=1 // pred_region
      _
    $region21: #{tpu_custom_call.1} parent=1 // pred_fallthru
      _
    // Predicated region
    $region22: #{tpu_custom_call.1} parent=1 // pred_check
      _
    $region23: #{tpu_custom_call.1} parent=1 // pred_check_branch
      %55 = sbr.rel (0) target = $region25
    $region24: #{tpu_custom_call.1} parent=1 // pred_region
      %s57 = ssub.s32 1024, 1024
      %58 = vsyncadd [#allocation9], %s57
      %s59 = sshll.u32 [#allocation8], 4
      %s60 = int_to_ptr.vmem [resolvable:$true] %s59
      %65 = dma.hbm_to_vmem [thread:$0]  %s5, 1024, %s60, [#allocation9], 64, 64, 4
    $region25: #{tpu_custom_call.1} parent=1 // pred_fallthru
      _
    // Predicated region
    $region26: #{tpu_custom_call.1} parent=1 // pred_check
      _
    $region27: #{tpu_custom_call.1} parent=1 // pred_check_branch
      %67 = sbr.rel (0) target = $region29
    $region28: #{tpu_custom_call.1} parent=1 // pred_region
      _
    $region29: #{tpu_custom_call.1} parent=1 // pred_fallthru
      _
    // Predicated region
    $region30: #{tpu_custom_call.1} parent=1 // pred_check
      _
    $region31: #{tpu_custom_call.1} parent=1 // pred_check_branch
      %69 = sbr.rel (0) target = $region33
    $region32: #{tpu_custom_call.1} parent=1 // pred_region
      %70 = dma.done [#allocation3], 128
    $region33: #{tpu_custom_call.1} parent=1 // pred_fallthru
      _
    // Predicated region
    $region34: #{tpu_custom_call.1} parent=1 // pred_check
      _
    $region35: #{tpu_custom_call.1} parent=1 // pred_check_branch
      %72 = sbr.rel (0) target = $region37
    $region36: #{tpu_custom_call.1} parent=1 // pred_region
      %73 = dma.done [#allocation6], 2048
    $region37: #{tpu_custom_call.1} parent=1 // pred_fallthru
      _
    // Predicated region
    $region38: #{tpu_custom_call.1} parent=1 // pred_check
      _
    $region39: #{tpu_custom_call.1} parent=1 // pred_check_branch
      %75 = sbr.rel (0) target = $region41
    $region40: #{tpu_custom_call.1} parent=1 // pred_region
      %76 = dma.done [#allocation6], 1024
    $region41: #{tpu_custom_call.1} parent=1 // pred_fallthru
      _
    // Predicated region
    $region42: #{tpu_custom_call.1} parent=1 // pred_check
      _
    $region43: #{tpu_custom_call.1} parent=1 // pred_check_branch
      %78 = sbr.rel (0) target = $region45
    $region44: #{tpu_custom_call.1} parent=1 // pred_region
      %79 = dma.done [#allocation9], 1024
    $region45: #{tpu_custom_call.1} parent=1 // pred_fallthru
      _
    %v81 = vld [vmem:[#allocation2] sm:$0xff]
    %v82 = vpack.c.bf16 %v81, %v81
    %v83 = vld [vmem:[#allocation5] sm:$0xff]
    %v84 = vld [vmem:[#allocation5 + $0x8] sm:$0xff]
    %v85 = vld [vmem:[#allocation5 + $0x10] sm:$0xff]
    %v86 = vld [vmem:[#allocation5 + $0x18] sm:$0xff]
    %v87 = vld [vmem:[#allocation5 + $0x20] sm:$0xff]
    %v88 = vld [vmem:[#allocation5 + $0x28] sm:$0xff]
    %v89 = vld [vmem:[#allocation5 + $0x30] sm:$0xff]
    %v90 = vld [vmem:[#allocation5 + $0x38] sm:$0xff]
    %v91 = vld [vmem:[#allocation5 + $0x40] sm:$0xff]
    %v92 = vld [vmem:[#allocation5 + $0x48] sm:$0xff]
    %v93 = vld [vmem:[#allocation5 + $0x50] sm:$0xff]
    %v94 = vld [vmem:[#allocation5 + $0x58] sm:$0xff]
    %v95 = vld [vmem:[#allocation5 + $0x60] sm:$0xff]
    %v96 = vld [vmem:[#allocation5 + $0x68] sm:$0xff]
    %v97 = vld [vmem:[#allocation5 + $0x70] sm:$0xff]
    %v98 = vld [vmem:[#allocation5 + $0x78] sm:$0xff]
    %v99 = vld [vmem:[%s2] sm:$0x3]
    %v101 = vlaneseq
    %v102 = vshrl.u32 %v101, 7
    %v103 = vsub.s32 0, %v102
    %v104 = vrot.slane %v99, %v103
    %v105 = vlaneseq
    %v106 = vshrl.u32 %v105, 7
    %v107 = vsub.s32 1, %v106
    %v108 = vrot.slane %v99, %v107
    %v127 = vunpack.c.l.b16 %v83
    %v128 = vunpack.c.h.b16 %v83
    %v129 = vunpack.c.l.b16 %v84
    %v130 = vunpack.c.h.b16 %v84
    %v131 = vunpack.c.l.b16 %v85
    %v132 = vunpack.c.h.b16 %v85
    %v133 = vunpack.c.l.b16 %v86
    %v134 = vunpack.c.h.b16 %v86
    %v135 = vunpack.c.l.b16 %v87
    %v136 = vunpack.c.h.b16 %v87
    %v137 = vunpack.c.l.b16 %v88
    %v138 = vunpack.c.h.b16 %v88
    %v139 = vunpack.c.l.b16 %v89
    %v140 = vunpack.c.h.b16 %v89
    %v141 = vunpack.c.l.b16 %v90
    %v142 = vunpack.c.h.b16 %v90
    %v143 = vunpack.c.l.b16 %v91
    %v144 = vunpack.c.h.b16 %v91
    %v145 = vunpack.c.l.b16 %v92
    %v146 = vunpack.c.h.b16 %v92
    %v147 = vunpack.c.l.b16 %v93
    %v148 = vunpack.c.h.b16 %v93
    %v149 = vunpack.c.l.b16 %v94
    %v150 = vunpack.c.h.b16 %v94
    %v151 = vunpack.c.l.b16 %v95
    %v152 = vunpack.c.h.b16 %v95
    %v153 = vunpack.c.l.b16 %v96
    %v154 = vunpack.c.h.b16 %v96
    %v155 = vunpack.c.l.b16 %v97
    %v156 = vunpack.c.h.b16 %v97
    %v157 = vunpack.c.l.b16 %v98
    %v158 = vunpack.c.h.b16 %v98
    %v159 = vpack.c.b16 %v129, %v127
    %v160 = vpack.c.b16 %v130, %v128
    %v161 = vpack.c.b16 %v133, %v131
    %v162 = vpack.c.b16 %v134, %v132
    %v163 = vpack.c.b16 %v137, %v135
    %v164 = vpack.c.b16 %v138, %v136
    %v165 = vpack.c.b16 %v141, %v139
    %v166 = vpack.c.b16 %v142, %v140
    %v167 = vpack.c.b16 %v145, %v143
    %v168 = vpack.c.b16 %v146, %v144
    %v169 = vpack.c.b16 %v149, %v147
    %v170 = vpack.c.b16 %v150, %v148
    %v171 = vpack.c.b16 %v153, %v151
    %v172 = vpack.c.b16 %v154, %v152
    %v173 = vpack.c.b16 %v157, %v155
    %v174 = vpack.c.b16 %v158, %v156
    %191 = vmatprep.subr.bf16.mxu0 %v160
    %192 = vmatpush1.bf16.msra.mxu0 %v159
    %193 = vmatprep.subr.bf16.mxu0 %v162
    %194 = vmatpush1.bf16.msra.mxu0 %v161
    %195 = vmatprep.subr.bf16.mxu0 %v164
    %196 = vmatpush1.bf16.msra.mxu0 %v163
    %197 = vmatprep.subr.bf16.mxu0 %v166
    %198 = vmatpush1.bf16.msra.mxu0 %v165
    %199 = vmatprep.subr.bf16.mxu0 %v168
    %200 = vmatpush1.bf16.msra.mxu0 %v167
    %201 = vmatprep.subr.bf16.mxu0 %v170
    %202 = vmatpush1.bf16.msra.mxu0 %v169
    %203 = vmatprep.subr.bf16.mxu0 %v172
    %204 = vmatpush1.bf16.msra.mxu0 %v171
    %205 = vmatprep.subr.bf16.mxu0 %v174
    %206 = vmatpush1.bf16.msra.mxu0 %v173
    %207 = vmatprep.subr.bf16.mxu0 0
    %208 = vmatpush1.bf16.msra.mxu0 0
    %209 = vmatprep.subr.bf16.mxu0 0
    %210 = vmatpush1.bf16.msra.mxu0 0
    %211 = vmatprep.subr.bf16.mxu0 0
    %212 = vmatpush1.bf16.msra.mxu0 0
    %213 = vmatprep.subr.bf16.mxu0 0
    %214 = vmatpush1.bf16.msra.mxu0 0
    %215 = vmatprep.subr.bf16.mxu0 0
    %216 = vmatpush1.bf16.msra.mxu0 0
    %217 = vmatprep.subr.bf16.mxu0 0
    %218 = vmatpush1.bf16.msra.mxu0 0
    %219 = vmatprep.subr.bf16.mxu0 0
    %220 = vmatpush1.bf16.msra.mxu0 0
    %221 = vmatprep.subr.bf16.mxu0 0
    %222 = vmatpush1.bf16.msra.mxu0 0
    %223 = vmatprep.mubr.bf16.mxu0 0
    %224 = vmatmul.mubr.bf16.gmra.mrb[0].mxu0 %v82
    %v225 = vpop.f32.mrb[0].mxu0
    %v226 = vadd.f32 %v104, %v225
    %v227 = vpop.f32.mrb[0].mxu0
    %v228 = vadd.f32 %v108, %v227
    %v229 = vpop.f32.mrb[0].mxu0
    %v230 = vpop.f32.mrb[0].mxu0
    %231 = vdwg.mxu0
    %v232 = vmax.f32 %v226, 0.0
    %v233 = vmax.f32 %v228, 0.0
    %v234 = vadd.f32 %v232, %v233
    %v235 = vxor.u32 %v234, 2147483648
    %v236 = vmul.f32 %v235, 1.442695
    %v237 = vpow.pop %v236
    %v238 = vadd.f32 %v237, 1.0
    %v239 = vrcp.pop %v238
    %v240 = vmul.f32 1.0, %v239
    %v241 = vmul.f32 %v240, %v81
    %v242 = vpack.c.bf16 %v241, %v241
    %v243 = vld [vmem:[#allocation7] sm:$0xf]
    %v244 = vld [vmem:[#allocation7 + $0x4] sm:$0xf]
    %v245 = vld [vmem:[#allocation7 + $0x8] sm:$0xf]
    %v246 = vld [vmem:[#allocation7 + $0xc] sm:$0xf]
    %v247 = vld [vmem:[#allocation7 + $0x10] sm:$0xf]
    %v248 = vld [vmem:[#allocation7 + $0x14] sm:$0xf]
    %v249 = vld [vmem:[#allocation7 + $0x18] sm:$0xf]
    %v250 = vld [vmem:[#allocation7 + $0x1c] sm:$0xf]
    %v251 = vld [vmem:[#allocation7 + $0x20] sm:$0xf]
    %v252 = vld [vmem:[#allocation7 + $0x24] sm:$0xf]
    %v253 = vld [vmem:[#allocation7 + $0x28] sm:$0xf]
    %v254 = vld [vmem:[#allocation7 + $0x2c] sm:$0xf]
    %v255 = vld [vmem:[#allocation7 + $0x30] sm:$0xf]
    %v256 = vld [vmem:[#allocation7 + $0x34] sm:$0xf]
    %v257 = vld [vmem:[#allocation7 + $0x38] sm:$0xf]
    %v258 = vld [vmem:[#allocation7 + $0x3c] sm:$0xf]
    %v259 = vld [vmem:[%s4] sm:$0x1]
    %v261 = vlaneseq
    %v262 = vshrl.u32 %v261, 7
    %v263 = vsub.s32 0, %v262
    %v264 = vrot.slane %v259, %v263
    %v282 = vunpack.c.l.b16 %v243
    %v283 = vunpack.c.l.b16 %v244
    %v284 = vunpack.c.l.b16 %v245
    %v285 = vunpack.c.l.b16 %v246
    %v286 = vunpack.c.l.b16 %v247
    %v287 = vunpack.c.l.b16 %v248
    %v288 = vunpack.c.l.b16 %v249
    %v289 = vunpack.c.l.b16 %v250
    %v290 = vunpack.c.l.b16 %v251
    %v291 = vunpack.c.l.b16 %v252
    %v292 = vunpack.c.l.b16 %v253
    %v293 = vunpack.c.l.b16 %v254
    %v294 = vunpack.c.l.b16 %v255
    %v295 = vunpack.c.l.b16 %v256
    %v296 = vunpack.c.l.b16 %v257
    %v297 = vunpack.c.l.b16 %v258
    %v298 = vpack.c.b16 %v283, %v282
    %v299 = vpack.c.b16 %v285, %v284
    %v300 = vpack.c.b16 %v287, %v286
    %v301 = vpack.c.b16 %v289, %v288
    %v302 = vpack.c.b16 %v291, %v290
    %v303 = vpack.c.b16 %v293, %v292
    %v304 = vpack.c.b16 %v295, %v294
    %v305 = vpack.c.b16 %v297, %v296
    %314 = vmatprep.subr.bf16.mxu0 0
    %315 = vmatpush1.bf16.msra.mxu0 %v298
    %316 = vmatprep.subr.bf16.mxu0 0
    %317 = vmatpush1.bf16.msra.mxu0 %v299
    %318 = vmatprep.subr.bf16.mxu0 0
    %319 = vmatpush1.bf16.msra.mxu0 %v300
    %320 = vmatprep.subr.bf16.mxu0 0
    %321 = vmatpush1.bf16.msra.mxu0 %v301
    %322 = vmatprep.subr.bf16.mxu0 0
    %323 = vmatpush1.bf16.msra.mxu0 %v302
    %324 = vmatprep.subr.bf16.mxu0 0
    %325 = vmatpush1.bf16.msra.mxu0 %v303
    %326 = vmatprep.subr.bf16.mxu0 0
    %327 = vmatpush1.bf16.msra.mxu0 %v304
    %328 = vmatprep.subr.bf16.mxu0 0
    %329 = vmatpush1.bf16.msra.mxu0 %v305
    %330 = vmatprep.subr.bf16.mxu0 0
    %331 = vmatpush1.bf16.msra.mxu0 0
    %332 = vmatprep.subr.bf16.mxu0 0
    %333 = vmatpush1.bf16.msra.mxu0 0
    %334 = vmatprep.subr.bf16.mxu0 0
    %335 = vmatpush1.bf16.msra.mxu0 0
    %336 = vmatprep.subr.bf16.mxu0 0
    %337 = vmatpush1.bf16.msra.mxu0 0
    %338 = vmatprep.subr.bf16.mxu0 0
    %339 = vmatpush1.bf16.msra.mxu0 0
    %340 = vmatprep.subr.bf16.mxu0 0
    %341 = vmatpush1.bf16.msra.mxu0 0
    %342 = vmatprep.subr.bf16.mxu0 0
    %343 = vmatpush1.bf16.msra.mxu0 0
    %344 = vmatprep.subr.bf16.mxu0 0
    %345 = vmatpush1.bf16.msra.mxu0 0
    %346 = vmatprep.mubr.bf16.mxu0 0
    %347 = vmatmul.mubr.bf16.gmra.mrb[0].mxu0 %v242
    %v348 = vpop.f32.mrb[0].mxu0
    %v349 = vadd.f32 %v264, %v348
    %v350 = vpop.f32.mrb[0].mxu0
    %v351 = vpop.f32.mrb[0].mxu0
    %v352 = vpop.f32.mrb[0].mxu0
    %353 = vdwg.mxu0
    %v354 = vmax.f32 %v349, 0.0
    %v355 = vxor.u32 %v354, 2147483648
    %v356 = vmul.f32 %v355, 1.442695
    %v357 = vpow.pop %v356
    %v358 = vadd.f32 %v357, 1.0
    %v359 = vrcp.pop %v358
    %v360 = vmul.f32 1.0, %v359
    %v361 = vmul.f32 %v360, %v241
    %v362 = vadd.f32 %v81, %v361
    %v363 = vpack.c.bf16 %v362, %v362
    %v364 = vld [vmem:[#allocation8] sm:$0xf]
    %v365 = vld [vmem:[#allocation8 + $0x4] sm:$0xf]
    %v366 = vld [vmem:[#allocation8 + $0x8] sm:$0xf]
    %v367 = vld [vmem:[#allocation8 + $0xc] sm:$0xf]
    %v368 = vld [vmem:[#allocation8 + $0x10] sm:$0xf]
    %v369 = vld [vmem:[#allocation8 + $0x14] sm:$0xf]
    %v370 = vld [vmem:[#allocation8 + $0x18] sm:$0xf]
    %v371 = vld [vmem:[#allocation8 + $0x1c] sm:$0xf]
    %v372 = vld [vmem:[#allocation8 + $0x20] sm:$0xf]
    %v373 = vld [vmem:[#allocation8 + $0x24] sm:$0xf]
    %v374 = vld [vmem:[#allocation8 + $0x28] sm:$0xf]
    %v375 = vld [vmem:[#allocation8 + $0x2c] sm:$0xf]
    %v376 = vld [vmem:[#allocation8 + $0x30] sm:$0xf]
    %v377 = vld [vmem:[#allocation8 + $0x34] sm:$0xf]
    %v378 = vld [vmem:[#allocation8 + $0x38] sm:$0xf]
    %v379 = vld [vmem:[#allocation8 + $0x3c] sm:$0xf]
    %v380 = vld [vmem:[%s6] sm:$0x1]
    %v382 = vlaneseq
    %v383 = vshrl.u32 %v382, 7
    %v384 = vsub.s32 0, %v383
    %v385 = vrot.slane %v380, %v384
    %v403 = vunpack.c.l.b16 %v364
    %v404 = vunpack.c.l.b16 %v365
    %v405 = vunpack.c.l.b16 %v366
    %v406 = vunpack.c.l.b16 %v367
    %v407 = vunpack.c.l.b16 %v368
    %v408 = vunpack.c.l.b16 %v369
    %v409 = vunpack.c.l.b16 %v370
    %v410 = vunpack.c.l.b16 %v371
    %v411 = vunpack.c.l.b16 %v372
    %v412 = vunpack.c.l.b16 %v373
    %v413 = vunpack.c.l.b16 %v374
    %v414 = vunpack.c.l.b16 %v375
    %v415 = vunpack.c.l.b16 %v376
    %v416 = vunpack.c.l.b16 %v377
    %v417 = vunpack.c.l.b16 %v378
    %v418 = vunpack.c.l.b16 %v379
    %v419 = vpack.c.b16 %v404, %v403
    %v420 = vpack.c.b16 %v406, %v405
    %v421 = vpack.c.b16 %v408, %v407
    %v422 = vpack.c.b16 %v410, %v409
    %v423 = vpack.c.b16 %v412, %v411
    %v424 = vpack.c.b16 %v414, %v413
    %v425 = vpack.c.b16 %v416, %v415
    %v426 = vpack.c.b16 %v418, %v417
    %435 = vmatprep.subr.bf16.mxu0 0
    %436 = vmatpush1.bf16.msra.mxu0 %v419
    %437 = vmatprep.subr.bf16.mxu0 0
    %438 = vmatpush1.bf16.msra.mxu0 %v420
    %439 = vmatprep.subr.bf16.mxu0 0
    %440 = vmatpush1.bf16.msra.mxu0 %v421
    %441 = vmatprep.subr.bf16.mxu0 0
    %442 = vmatpush1.bf16.msra.mxu0 %v422
    %443 = vmatprep.subr.bf16.mxu0 0
    %444 = vmatpush1.bf16.msra.mxu0 %v423
    %445 = vmatprep.subr.bf16.mxu0 0
    %446 = vmatpush1.bf16.msra.mxu0 %v424
    %447 = vmatprep.subr.bf16.mxu0 0
    %448 = vmatpush1.bf16.msra.mxu0 %v425
    %449 = vmatprep.subr.bf16.mxu0 0
    %450 = vmatpush1.bf16.msra.mxu0 %v426
    %451 = vmatprep.subr.bf16.mxu0 0
    %452 = vmatpush1.bf16.msra.mxu0 0
    %453 = vmatprep.subr.bf16.mxu0 0
    %454 = vmatpush1.bf16.msra.mxu0 0
    %455 = vmatprep.subr.bf16.mxu0 0
    %456 = vmatpush1.bf16.msra.mxu0 0
    %457 = vmatprep.subr.bf16.mxu0 0
    %458 = vmatpush1.bf16.msra.mxu0 0
    %459 = vmatprep.subr.bf16.mxu0 0
    %460 = vmatpush1.bf16.msra.mxu0 0
    %461 = vmatprep.subr.bf16.mxu0 0
    %462 = vmatpush1.bf16.msra.mxu0 0
    %463 = vmatprep.subr.bf16.mxu0 0
    %464 = vmatpush1.bf16.msra.mxu0 0
    %465 = vmatprep.subr.bf16.mxu0 0
    %466 = vmatpush1.bf16.msra.mxu0 0
    %467 = vmatprep.mubr.bf16.mxu0 0
    %468 = vmatmul.mubr.bf16.gmra.mrb[0].mxu0 %v363
    %v469 = vpop.f32.mrb[0].mxu0
    %v470 = vadd.f32 %v385, %v469
    %v471 = vpop.f32.mrb[0].mxu0
    %v472 = vpop.f32.mrb[0].mxu0
    %v473 = vpop.f32.mrb[0].mxu0
    %474 = vdwg.mxu0
    %475 = vst [vmem:[#allocation10] sm:$0xff] %v470
    // Predicated region
    $region46: #{tpu_custom_call.1} parent=1 // pred_check
      _
    $region47: #{tpu_custom_call.1} parent=1 // pred_check_branch
      %477 = sbr.rel (0) target = $region49
    $region48: #{tpu_custom_call.1} parent=1 // pred_region
      %s479 = ssub.s32 128, 128
      %480 = vsyncadd [#allocation4], %s479
      %s482 = sshll.u32 [#allocation10], 4
      %s483 = int_to_ptr.vmem [resolvable:$true] %s482
      %485 = dma.vmem_to_hbm [thread:$0]  %s483, 128, %s7, [#allocation4]
    $region49: #{tpu_custom_call.1} parent=1 // pred_fallthru
      _
    // Predicated region
    $region50: #{tpu_custom_call.1} parent=1 // pred_check
      _
    $region51: #{tpu_custom_call.1} parent=1 // pred_check_branch
      %487 = sbr.rel (0) target = $region53
    $region52: #{tpu_custom_call.1} parent=1 // pred_region
      %488 = dma.done [#allocation4], 128
    $region53: #{tpu_custom_call.1} parent=1 // pred_fallthru
      _
    %489 = vsyncpa [#allocation3], 1
    %490 = vsyncpa [#allocation6], 1
    %491 = vsyncpa [#allocation9], 1
    %492 = vsyncpa [#allocation4], 1

</llo_original>
